<compile_context>
chip_gen: v7x
topology: tpu7x:2x2x1
jax: 0.10.0
libtpu: 0.0.40
codegen_flags: <defaults>
</compile_context>

<pallas_src>
import jax
import jax.numpy as jnp
from jax.experimental import pallas as pl
from jax.experimental.pallas import tpu as pltpu


def _const_eq_kernel(cols_ref, out_ref):
    # cols_ref: (4, TB) -- rows are the 4 selected columns, batch on lanes.
    c = cols_ref[...].astype(jnp.float32)
    s = (c[0:1, :] + c[1:2, :]) + (c[2:3, :] + c[3:4, :])   # (1, TB) VPU adds
    out_ref[...] = (s * 0.25).astype(out_ref.dtype)


def constant_equality_generative(x, ixs_active, ixs_inactive=None, *,
                                 tile_b=2048):
    """x: tuple (ll1, ll2, ll3, ll4, lp1, lp2, lp3, lp4); lp* are ignored."""
    ll1, ll2, ll3, ll4 = x[0], x[1], x[2], x[3]
    a0 = int(ixs_active[0])
    a1 = int(ixs_active[1])
    a2 = int(ixs_active[2])
    i3 = 1 if a2 >= 10 else 0
    i4 = a2 % 10

    B = ll1.shape[0]
    out_dtype = jnp.result_type(ll1.dtype, ll2.dtype, ll3.dtype, ll4.dtype)

    # Gather only the 4 needed columns and lay the batch on the lane axis.
    cols = jnp.stack(
        [ll1[:, a0], ll2[:, a1], ll3[:, i3], ll4[:, i4]], axis=0)  # (4, B)

    # Lane-friendly batch tiling.  Small B -> one full-extent block (allowed
    # by the (8,128) rule when block_shape == full array dims).  Large B ->
    # 128-multiple tiles, batch padded up to a tile boundary.
    tile_b = max(128, (tile_b // 128) * 128)
    if B <= tile_b:
        tb = B
        b_padded = B
    else:
        tb = tile_b
        b_padded = pl.cdiv(B, tb) * tb
        if b_padded != B:
            cols = jnp.pad(cols, ((0, 0), (0, b_padded - B)))
    grid = (b_padded // tb,)

    out = pl.pallas_call(
        _const_eq_kernel,
        out_shape=jax.ShapeDtypeStruct((1, b_padded), out_dtype),
        grid=grid,
        in_specs=[pl.BlockSpec((4, tb), lambda i: (0, i))],
        out_specs=pl.BlockSpec((1, tb), lambda i: (0, i)),
        compiler_params=pltpu.CompilerParams(
            dimension_semantics=("parallel",)),
    )(cols)
    return out[0, :B]   # (B,), matching PyTorch's advanced-index column select


if __name__ == "__main__":
    key = jax.random.PRNGKey(0)
    k1, k2, k3, k4, k5, k6, k7, k8 = jax.random.split(key, 8)

    B = 8
    ll1 = jax.random.normal(k1, (B, 20), dtype=jnp.float32)
    ll2 = jax.random.normal(k2, (B, 20), dtype=jnp.float32)
    ll3 = jax.random.normal(k3, (B, 2), dtype=jnp.float32)
    ll4 = jax.random.normal(k4, (B, 10), dtype=jnp.float32)
    # lp* tensors are part of the input tuple but unused by forward.
    lp1 = jax.random.normal(k5, (B, 20), dtype=jnp.float32)
    lp2 = jax.random.normal(k6, (B, 20), dtype=jnp.float32)
    lp3 = jax.random.normal(k7, (B, 2), dtype=jnp.float32)
    lp4 = jax.random.normal(k8, (B, 10), dtype=jnp.float32)

    ixs_active = [3, 7, 12]      # deterministic "constructor" config
    ixs_inactive = [0, 1, 2]

    x = (ll1, ll2, ll3, ll4, lp1, lp2, lp3, lp4)
    out = constant_equality_generative(x, ixs_active, ixs_inactive)
    out = jax.block_until_ready(out)

    ref = (ll1[:, 3] + ll2[:, 7] + ll3[:, 1] + ll4[:, 2]) / 4.0
    assert out.shape == (B,)
    assert out.dtype == ll1.dtype
    assert jnp.allclose(out, ref, atol=1e-6), "mismatch vs reference (small B)"

    # Exercise the tiled, padded, multi-block grid path as well.
    B2 = 2500   # > tile_b, not a multiple of 128 -> padding + 2 grid steps
    m1 = jax.random.normal(k1, (B2, 20), dtype=jnp.float32)
    m2 = jax.random.normal(k2, (B2, 20), dtype=jnp.float32)
    m3 = jax.random.normal(k3, (B2, 2), dtype=jnp.float32)
    m4 = jax.random.normal(k4, (B2, 10), dtype=jnp.float32)
    x2 = (m1, m2, m3, m4, m1, m2, m3, m4)
    out2 = constant_equality_generative(x2, ixs_active, ixs_inactive)
    out2 = jax.block_until_ready(out2)
    ref2 = (m1[:, 3] + m2[:, 7] + m3[:, 1] + m4[:, 2]) / 4.0
    assert out2.shape == (B2,)
    assert jnp.allclose(out2, ref2, atol=1e-6), "mismatch vs reference (tiled)"

    print("KERNEL_OK")
</pallas_src>

<mosaic_0001>
module attributes {stable_mosaic.version = 11 : i64} {
  func.func @_const_eq_kernel(%arg0: i32, %arg1: memref<4x8xf32, #tpu.memory_space<vmem>>, %arg2: memref<1x8xf32, #tpu.memory_space<vmem>>) attributes {dimension_semantics = [#tpu.dimension_semantics<parallel>], iteration_bounds = array<i64: 1>, scalar_prefetch = 0 : i64, scratch_operands = 0 : i64, tpu.core_type = #tpu.core_type<tc>, window_params = [{transform_indices = @transform_0, window_bounds = array<i64: 4, 8>}, {transform_indices = @transform_1, window_bounds = array<i64: 1, 8>}]} {
    %c0 = arith.constant 0 : index
    %c0_0 = arith.constant 0 : index
    %0 = vector.load %arg1[%c0, %c0_0] : memref<4x8xf32, #tpu.memory_space<vmem>>, vector<4x8xf32>
    %1 = vector.extract_strided_slice %0 {offsets = [0, 0], sizes = [1, 8], strides = [1, 1]} : vector<4x8xf32> to vector<1x8xf32>
    %2 = vector.extract_strided_slice %0 {offsets = [1, 0], sizes = [1, 8], strides = [1, 1]} : vector<4x8xf32> to vector<1x8xf32>
    %3 = arith.addf %1, %2 : vector<1x8xf32>
    %4 = vector.extract_strided_slice %0 {offsets = [2, 0], sizes = [1, 8], strides = [1, 1]} : vector<4x8xf32> to vector<1x8xf32>
    %5 = vector.extract_strided_slice %0 {offsets = [3, 0], sizes = [1, 8], strides = [1, 1]} : vector<4x8xf32> to vector<1x8xf32>
    %6 = arith.addf %4, %5 : vector<1x8xf32>
    %7 = arith.addf %3, %6 : vector<1x8xf32>
    %cst = arith.constant 2.500000e-01 : f32
    %8 = vector.broadcast %cst : f32 to vector<1x8xf32>
    %9 = arith.mulf %7, %8 : vector<1x8xf32>
    %c0_1 = arith.constant 0 : index
    %c0_2 = arith.constant 0 : index
    %10 = vector.load %arg2[%c0_1, %c0_2] : memref<1x8xf32, #tpu.memory_space<vmem>>, vector<1x8xf32>
    tpu.vector_store %arg2[%c0_1, %c0_2], %9 {strides = array<i32>} : memref<1x8xf32, #tpu.memory_space<vmem>>, vector<1x8xf32>,
    return
  }
  func.func @transform_0(%arg0: i32) -> (i32, i32) {
    %c0_i32 = arith.constant 0 : i32
    %c0_i32_0 = arith.constant 0 : i32
    return %c0_i32, %arg0 : i32, i32
  }
  func.func @transform_1(%arg0: i32) -> (i32, i32) {
    %c0_i32 = arith.constant 0 : i32
    %c0_i32_0 = arith.constant 0 : i32
    return %c0_i32, %arg0 : i32, i32
  }
}

</mosaic_0001>

<llo_original>
// kernel: tpu_custom_call.1
$region0: #{tpu_custom_call.1}
  #allocation0 [shape = 'u32[]', space=smem, size = 0x4, offset = 0x4, fixed_abs, tag = 'smem constant byte address 0x4 - core index']
  #allocation1 [shape = 'u32[144,128]{1,0:T(1,128)}', space=vmem, size = 0x12000, scoped, tag = 'internal scratch']
  %s0 = inlined_call_operand.hbm [shape: f32[4,8], index: 0, kind: input, shape index: {}]
  %s1 = inlined_call_operand.hbm [shape: f32[1,8], index: 1, kind: output, shape index: {}]
  %s2 = sld [smem:[#allocation0]]
  $region18: #{tpu_custom_call.1} parent=0
    _
  %s4 = ssub.s32 1, %s2
  %s5 = scalar_select 0, %s4, %s2
  $region1: #{tpu_custom_call.1} parent=0
    #allocation2 [shape = 'u8[2048]{0}', space=vmem, size = 0x800, scoped, tag = 'input window, operand 0, single buffered']
    #allocation3 [shape = 's32[1]{0}', space=sflag, size = 0x4, scoped, tag = 'scoped memory for tpu_custom_call.1']
    #allocation4 [shape = 's32[1]{0}', space=sflag, size = 0x4, scoped, tag = 'scoped memory for tpu_custom_call.1']
    #allocation5 [shape = 'u8[512]{0}', space=vmem, size = 0x400, scoped, tag = 'output window, operand 0, single buffered']
    %6 = vsyncpa [#allocation3], 0
    %7 = vsyncpa [#allocation4], 0
    // Predicated region
    $region2: #{tpu_custom_call.1} parent=1 // pred_check
      _
    $region3: #{tpu_custom_call.1} parent=1 // pred_check_branch
      %9 = sbr.rel (0) target = $region5
    $region4: #{tpu_custom_call.1} parent=1 // pred_region
      %s11 = ssub.s32 64, 64
      %12 = vsyncadd [#allocation3], %s11
      %s14 = sshll.u32 [#allocation2], 4
      %s15 = int_to_ptr.vmem [resolvable:$true] %s14
      %17 = dma.hbm_to_vmem [thread:$0]  %s0, 64, %s15, [#allocation3]
    $region5: #{tpu_custom_call.1} parent=1 // pred_fallthru
      _
    // Predicated region
    $region6: #{tpu_custom_call.1} parent=1 // pred_check
      _
    $region7: #{tpu_custom_call.1} parent=1 // pred_check_branch
      %19 = sbr.rel (0) target = $region9
    $region8: #{tpu_custom_call.1} parent=1 // pred_region
      %20 = dma.done [#allocation3], 64
    $region9: #{tpu_custom_call.1} parent=1 // pred_fallthru
      _
    %v21 = vld [vmem:[#allocation2] sm:$0xf]
    %v23 = vrot.slane %v21, 1
    %v25 = vadd.f32 %v21, %v23
    %v27 = vrot.slane %v25, 2
    %v29 = vadd.f32 %v25, %v27
    %v30 = vmul.f32 %v29, 0.25
    %vm31 = vcmask 57344
    %32 = vst.msk [vmem:[#allocation5] sm:$0x1] %vm31, %v30
    // Predicated region
    $region10: #{tpu_custom_call.1} parent=1 // pred_check
      _
    $region11: #{tpu_custom_call.1} parent=1 // pred_check_branch
      %34 = sbr.rel (0) target = $region13
    $region12: #{tpu_custom_call.1} parent=1 // pred_region
      %s36 = ssub.s32 16, 16
      %37 = vsyncadd [#allocation4], %s36
      %s39 = sshll.u32 [#allocation5], 4
      %s40 = int_to_ptr.vmem [resolvable:$true] %s39
      %42 = dma.vmem_to_hbm [thread:$0]  %s40, 16, %s1, [#allocation4]
    $region13: #{tpu_custom_call.1} parent=1 // pred_fallthru
      _
    // Predicated region
    $region14: #{tpu_custom_call.1} parent=1 // pred_check
      _
    $region15: #{tpu_custom_call.1} parent=1 // pred_check_branch
      %44 = sbr.rel (0) target = $region17
    $region16: #{tpu_custom_call.1} parent=1 // pred_region
      %45 = dma.done [#allocation4], 16
    $region17: #{tpu_custom_call.1} parent=1 // pred_fallthru
      _
    %46 = vsyncpa [#allocation3], 1
    %47 = vsyncpa [#allocation4], 1

</llo_original>
